<compile_context>
chip_gen: v6e
topology: v6e:2x2x1
jax: 0.10.0
libtpu: 0.0.40
codegen_flags: <defaults>
</compile_context>

<pallas_src>
import math
from typing import NamedTuple

import jax
import jax.numpy as jnp
from jax.experimental import pallas as pl
from jax.experimental.pallas import tpu as pltpu

_INV_SQRT2 = 1.0 / math.sqrt(2.0)


def _round_up(n, m):
    return ((n + m - 1) // m) * m


def _vmem_capacity_bytes():
    """Physical per-core VMEM, with a conservative fallback (v7x = 64 MiB)."""
    try:
        info = pltpu.get_tpu_info()
        for attr in ("vmem_capacity_bytes", "vmem_size_bytes", "vmem_bytes"):
            v = getattr(info, attr, None)
            if isinstance(v, int) and v > 0:
                return v
    except Exception:
        pass
    return 64 * 1024 * 1024


def _pick_hidden_tile(H, th_max=1024):
    """Return (th, H_pad): hidden tile (multiple of 128) and padded hidden dim
    such that H_pad % th == 0.  Prefer an exact divisor >= 512 (multiple of 256
    for MXU cadence); otherwise pad H up to a multiple of th_max."""
    H128 = _round_up(H, 128)
    if H128 <= th_max:
        return H128, H128
    for cand in range(th_max, 511, -256):
        if H128 % cand == 0:
            return cand, H128
    return th_max, _round_up(H, th_max)


class MlpParams(NamedTuple):
    w1: jax.Array          # (C, H_pad)  compute dtype (bf16)
    b1: jax.Array          # (1, H_pad)  f32
    w2: jax.Array          # (H_pad, O_pad) compute dtype (bf16)
    b2: jax.Array          # (1, O_pad)  f32
    in_features: int
    hidden_features: int
    out_features: int
    hidden_pad: int
    out_pad: int
    th: int


def prepare_mlp_params(w1, b1, w2, b2, *, compute_dtype=jnp.bfloat16, th_max=1024):
    """One-time parameter preparation (cast + pad), hoisted out of the hot path."""
    C, H = w1.shape
    O = w2.shape[1]
    th, H_pad = _pick_hidden_tile(H, th_max)
    O_pad = _round_up(O, 128)

    w1p = w1.astype(compute_dtype)
    w2p = w2.astype(compute_dtype)
    b1p = b1.astype(jnp.float32).reshape(1, H)
    b2p = b2.astype(jnp.float32).reshape(1, O)
    if H_pad != H:
        w1p = jnp.pad(w1p, ((0, 0), (0, H_pad - H)))
        w2p = jnp.pad(w2p, ((0, H_pad - H), (0, 0)))
        b1p = jnp.pad(b1p, ((0, 0), (0, H_pad - H)))
    if O_pad != O:
        w2p = jnp.pad(w2p, ((0, 0), (0, O_pad - O)))
        b2p = jnp.pad(b2p, ((0, 0), (0, O_pad - O)))

    return MlpParams(w1=w1p, b1=b1p, w2=w2p, b2=b2p,
                     in_features=C, hidden_features=H, out_features=O,
                     hidden_pad=H_pad, out_pad=O_pad, th=th)


def _make_mlp_kernel(resident, th):
    """Grid: (token tiles, hidden tiles). Hidden axis is the reduction axis."""

    def kernel(x_ref, w1_ref, b1_ref, w2_ref, b2_ref, o_ref, acc_ref):
        k = pl.program_id(1)

        @pl.when(k == 0)
        def _init():
            acc_ref[...] = jnp.zeros_like(acc_ref)

        off = pl.multiple_of(k * th, 128)
        if resident:
            # Weights are VMEM-resident for the whole call (fetched once);
            # slice the current hidden chunk in-kernel.
            w1 = w1_ref[:, pl.ds(off, th)]
            w2 = w2_ref[pl.ds(off, th), :]
        else:
            # Streaming fallback: per-step weight slabs supplied by BlockSpecs.
            w1 = w1_ref[...]
            w2 = w2_ref[...]
        b1 = b1_ref[:, pl.ds(off, th)]

        # fc1 partial: (tm, C) @ (C, th) -> (tm, th), f32 accumulation on MXU.
        h = jnp.dot(x_ref[...], w1, preferred_element_type=jnp.float32)
        h = h + b1
        # Exact-erf GELU (matches nn.GELU default).
        h = 0.5 * h * (1.0 + jax.lax.erf(h * _INV_SQRT2))
        # fc2 partial: (tm, th) @ (th, O_pad) accumulated into f32 scratch.
        acc_ref[...] += jnp.dot(h.astype(w2.dtype), w2,
                                preferred_element_type=jnp.float32)

        @pl.when(k == pl.num_programs(1) - 1)
        def _finalize():
            o_ref[...] = (acc_ref[...] + b2_ref[...]).astype(o_ref.dtype)

    return kernel


def mlp_forward(x, params: MlpParams, *, tm=None):
    """x: (..., C). Returns (..., out_features)."""
    compute_dtype = params.w1.dtype
    C = params.in_features
    O = params.out_features
    H_pad, O_pad, th = params.hidden_pad, params.out_pad, params.th
    assert x.shape[-1] == C, "last dim of x must equal in_features"

    lead = x.shape[:-1]
    M = 1
    for d in lead:
        M *= int(d)

    w_item = jnp.dtype(compute_dtype).itemsize
    out_item = jnp.dtype(x.dtype).itemsize

    # ---- VMEM budget / execution-mode decision -------------------------
    cap = _vmem_capacity_bytes()
    vmem_limit = int(min(cap * 3 // 4, 100 << 20))   # 48 MiB on v7x, 96 MiB on v5e/v6e
    margin = 4 << 20

    def vmem_usage(tm_, resident_):
        if resident_:
            wbytes = 2 * (C * H_pad + H_pad * O_pad) * w_item   # 2x: pipeline buffers
        else:
            wbytes = 2 * (C * th + th * O_pad) * w_item
        return (wbytes
                + 2 * tm_ * C * w_item            # x tile (double-buffered)
                + 2 * tm_ * O_pad * out_item      # output tile (double-buffered)
                + tm_ * O_pad * 4                 # f32 accumulator scratch
                + 2 * tm_ * th * 4                # f32 hidden intermediate + recast
                + (H_pad + O_pad) * 4 * 2)        # biases

    if tm is None:
        tm_res, tm_str = 512, 1024                # streaming needs larger tm (HBM roofline)
    else:
        tm_res = tm_str = max(16, (tm // 16) * 16)

    tm_probe = max(16, min(tm_res, _round_up(M, 16)))
    resident = vmem_usage(tm_probe, True) + margin <= vmem_limit

    # ---- token-tile derivation ------------------------------------------
    tm_base = tm_res if resident else tm_str
    tm_eff = max(16, (min(tm_base, _round_up(M, 16)) // 16) * 16)
    if not resident:
        while vmem_usage(tm_eff, False) + margin > vmem_limit and tm_eff > 256:
            tm_eff = max(256, (tm_eff // 2 // 16) * 16)
    # Avoid padding x in HBM when a reasonably sized tile divides M exactly.
    if M % tm_eff and tm_eff >= 256:
        for cand in range(tm_eff, 255, -128):
            if M % cand == 0:
                tm_eff = cand
                break
    # Megacore: keep >= 2 token tiles when possible so "parallel" splits cores.
    if _round_up(M, tm_eff) // tm_eff == 1 and tm_eff >= 512 and tm_eff % 32 == 0:
        tm_eff //= 2

    M_pad = _round_up(M, tm_eff)
    n_m = M_pad // tm_eff
    n_k = H_pad // th

    # ---- activation preparation (params already padded/cast) ------------
    x2d = x.reshape(M, C).astype(compute_dtype)
    if M_pad != M:
        x2d = jnp.pad(x2d, ((0, M_pad - M), (0, 0)))

    # ---- specs -----------------------------------------------------------
    x_spec = pl.BlockSpec((tm_eff, C), lambda i, k: (i, 0))
    b1_spec = pl.BlockSpec((1, H_pad), lambda i, k: (0, 0))     # fetched once
    b2_spec = pl.BlockSpec((1, O_pad), lambda i, k: (0, 0))     # fetched once
    if resident:
        # Constant index_map -> the weight DMA happens exactly once per call.
        w1_spec = pl.BlockSpec((C, H_pad), lambda i, k: (0, 0))
        w2_spec = pl.BlockSpec((H_pad, O_pad), lambda i, k: (0, 0))
    else:
        w1_spec = pl.BlockSpec((C, th), lambda i, k: (0, k))
        w2_spec = pl.BlockSpec((th, O_pad), lambda i, k: (k, 0))
    out_spec = pl.BlockSpec((tm_eff, O_pad), lambda i, k: (i, 0))

    weight_bytes = (C * H_pad + H_pad * O_pad) * w_item
    weight_reads = 1 if resident else n_m
    cost = pl.CostEstimate(
        flops=2 * M_pad * (C * H_pad + H_pad * O_pad),
        transcendentals=M_pad * H_pad,
        bytes_accessed=(M_pad * C * w_item
                        + weight_reads * weight_bytes
                        + 4 * (H_pad + O_pad)
                        + M_pad * O_pad * out_item),
    )

    out2d = pl.pallas_call(
        _make_mlp_kernel(resident, th),
        out_shape=jax.ShapeDtypeStruct((M_pad, O_pad), x.dtype),
        grid_spec=pltpu.PrefetchScalarGridSpec(
            num_scalar_prefetch=0,
            grid=(n_m, n_k),
            in_specs=[x_spec, w1_spec, b1_spec, w2_spec, b2_spec],
            out_specs=out_spec,
            scratch_shapes=[pltpu.VMEM((tm_eff, O_pad), jnp.float32)],
        ),
        compiler_params=pltpu.CompilerParams(
            dimension_semantics=("parallel", "arbitrary"),
            vmem_limit_bytes=vmem_limit,
        ),
        cost_estimate=cost,
    )(x2d, params.w1, params.b1, params.w2, params.b2)

    return out2d[:M, :O].reshape(lead + (O,))


def _reference_mlp(x, w1, b1, w2, b2, compute_dtype=jnp.bfloat16):
    """Pure-JAX reference mirroring the kernel's bf16-compute / f32-accumulate."""
    xb = x.astype(compute_dtype)
    w1b = w1.astype(compute_dtype)
    w2b = w2.astype(compute_dtype)
    h = jnp.einsum("...c,ch->...h", xb, w1b, preferred_element_type=jnp.float32)
    h = h + b1.astype(jnp.float32)
    h = 0.5 * h * (1.0 + jax.lax.erf(h * _INV_SQRT2))
    out = jnp.einsum("...h,ho->...o", h.astype(compute_dtype), w2b,
                     preferred_element_type=jnp.float32)
    out = out + b2.astype(jnp.float32)
    return out.astype(x.dtype)


if __name__ == "__main__":
    # Small shapes consistent with the module's forward:
    # batch=2, seq=8, in_features=32, hidden_features=128, out_features=32
    B, S, C, Hf, O = 2, 8, 32, 128, 32

    key = jax.random.PRNGKey(0)
    kx, k1, kb1, k2, kb2 = jax.random.split(key, 5)

    x = jax.random.normal(kx, (B, S, C), dtype=jnp.float32)
    # Deterministic parameter init (Linear-style scaling).
    w1 = jax.random.normal(k1, (C, Hf), dtype=jnp.float32) / math.sqrt(C)
    b1 = jax.random.normal(kb1, (Hf,), dtype=jnp.float32) * 0.01
    w2 = jax.random.normal(k2, (Hf, O), dtype=jnp.float32) / math.sqrt(Hf)
    b2 = jax.random.normal(kb2, (O,), dtype=jnp.float32) * 0.01

    # Parameter cast/pad done once (hoisted out of the per-call path).
    params = prepare_mlp_params(w1, b1, w2, b2)

    out = mlp_forward(x, params)
    jax.block_until_ready(out)

    ref = _reference_mlp(x, w1, b1, w2, b2)
    assert out.shape == (B, S, O)
    assert jnp.allclose(out, ref, atol=1e-2, rtol=1e-2), "mismatch vs reference"

    print("KERNEL_OK")
</pallas_src>

<mosaic_0001>
module attributes {stable_mosaic.version = 11 : i64} {
  func.func @kernel(%arg0: i32, %arg1: i32, %arg2: memref<16x32xbf16, #tpu.memory_space<vmem>>, %arg3: memref<32x128xbf16, #tpu.memory_space<vmem>>, %arg4: memref<1x128xf32, #tpu.memory_space<vmem>>, %arg5: memref<128x128xbf16, #tpu.memory_space<vmem>>, %arg6: memref<1x128xf32, #tpu.memory_space<vmem>>, %arg7: memref<16x128xf32, #tpu.memory_space<vmem>>, %arg8: memref<16x128xf32, #tpu.memory_space<vmem>>) attributes {dimension_semantics = [#tpu.dimension_semantics<parallel>, #tpu.dimension_semantics<arbitrary>], iteration_bounds = array<i64: 1, 1>, scalar_prefetch = 0 : i64, scratch_operands = 1 : i64, tpu.core_type = #tpu.core_type<tc>, window_params = [{transform_indices = @transform_0, window_bounds = array<i64: 16, 32>}, {pipeline_mode = #tpu.pipeline_mode<synchronous>, transform_indices = @transform_1, window_bounds = array<i64: 32, 128>}, {pipeline_mode = #tpu.pipeline_mode<synchronous>, transform_indices = @transform_2, window_bounds = array<i64: 1, 128>}, {pipeline_mode = #tpu.pipeline_mode<synchronous>, transform_indices = @transform_3, window_bounds = array<i64: 128, 128>}, {pipeline_mode = #tpu.pipeline_mode<synchronous>, transform_indices = @transform_4, window_bounds = array<i64: 1, 128>}, {transform_indices = @transform_5, window_bounds = array<i64: 16, 128>}]} {
    %c0_i32 = arith.constant 0 : i32
    %0 = arith.cmpi eq, %arg1, %c0_i32 : i32
    %1 = arith.extui %0 : i1 to i32
    %c0_i32_0 = arith.constant 0 : i32
    %2 = arith.cmpi ne, %1, %c0_i32_0 : i32
    scf.if %2 {
      %cst_15 = arith.constant 0.000000e+00 : f32
      %31 = vector.broadcast %cst_15 : f32 to vector<16x128xf32>
      %c0_16 = arith.constant 0 : index
      %c0_17 = arith.constant 0 : index
      %32 = vector.load %arg8[%c0_16, %c0_17] : memref<16x128xf32, #tpu.memory_space<vmem>>, vector<16x128xf32>
      tpu.vector_store %arg8[%c0_16, %c0_17], %31 {strides = array<i32>} : memref<16x128xf32, #tpu.memory_space<vmem>>, vector<16x128xf32>,
    } else {
    }
    %c128_i32 = arith.constant 128 : i32
    %3 = arith.muli %arg1, %c128_i32 : i32
    %4 = tpu.assume_multiple %3, 128 : i32
    %c0 = arith.constant 0 : index
    %5 = arith.index_cast %4 : i32 to index
    %6 = vector.load %arg3[%c0, %5] : memref<32x128xbf16, #tpu.memory_space<vmem>>, vector<32x128xbf16>
    %7 = arith.index_cast %4 : i32 to index
    %c0_1 = arith.constant 0 : index
    %8 = vector.load %arg5[%7, %c0_1] : memref<128x128xbf16, #tpu.memory_space<vmem>>, vector<128x128xbf16>
    %c0_2 = arith.constant 0 : index
    %9 = arith.index_cast %4 : i32 to index
    %10 = vector.load %arg4[%c0_2, %9] : memref<1x128xf32, #tpu.memory_space<vmem>>, vector<1x128xf32>
    %c0_3 = arith.constant 0 : index
    %c0_4 = arith.constant 0 : index
    %11 = vector.load %arg2[%c0_3, %c0_4] : memref<16x32xbf16, #tpu.memory_space<vmem>>, vector<16x32xbf16>
    %cst = arith.constant dense<0.000000e+00> : vector<16x128xf32>
    %12 = tpu.matmul %11, %6, %cst {dimension_numbers = #tpu.dot_dimension_numbers<[1], [0], [0], [1], [0, 0, 1, 1], [], []>} : vector<16x32xbf16>, vector<32x128xbf16>, vector<16x128xf32> -> vector<16x128xf32>
    %13 = vector.broadcast %10 : vector<1x128xf32> to vector<16x128xf32>
    %14 = arith.addf %12, %13 : vector<16x128xf32>
    %cst_5 = arith.constant 5.000000e-01 : f32
    %15 = vector.broadcast %cst_5 : f32 to vector<16x128xf32>
    %16 = arith.mulf %15, %14 : vector<16x128xf32>
    %cst_6 = arith.constant 0.707106769 : f32
    %17 = vector.broadcast %cst_6 : f32 to vector<16x128xf32>
    %18 = arith.mulf %14, %17 : vector<16x128xf32>
    %19 = math.erf %18 : vector<16x128xf32>
    %cst_7 = arith.constant 1.000000e+00 : f32
    %20 = vector.broadcast %cst_7 : f32 to vector<16x128xf32>
    %21 = arith.addf %20, %19 : vector<16x128xf32>
    %22 = arith.mulf %16, %21 : vector<16x128xf32>
    %c0_8 = arith.constant 0 : index
    %c0_9 = arith.constant 0 : index
    %23 = vector.load %arg8[%c0_8, %c0_9] : memref<16x128xf32, #tpu.memory_space<vmem>>, vector<16x128xf32>
    %24 = arith.truncf %22 : vector<16x128xf32> to vector<16x128xbf16>
    %cst_10 = arith.constant dense<0.000000e+00> : vector<16x128xf32>
    %25 = tpu.matmul %24, %8, %cst_10 {dimension_numbers = #tpu.dot_dimension_numbers<[1], [0], [0], [1], [0, 0, 1, 1], [], []>} : vector<16x128xbf16>, vector<128x128xbf16>, vector<16x128xf32> -> vector<16x128xf32>
    %26 = arith.addf %23, %25 : vector<16x128xf32>
    %c0_11 = arith.constant 0 : index
    %c0_12 = arith.constant 0 : index
    %27 = vector.load %arg8[%c0_11, %c0_12] : memref<16x128xf32, #tpu.memory_space<vmem>>, vector<16x128xf32>
    tpu.vector_store %arg8[%c0_11, %c0_12], %26 {strides = array<i32>} : memref<16x128xf32, #tpu.memory_space<vmem>>, vector<16x128xf32>,
    %c0_i32_13 = arith.constant 0 : i32
    %28 = arith.cmpi eq, %arg1, %c0_i32_13 : i32
    %29 = arith.extui %28 : i1 to i32
    %c0_i32_14 = arith.constant 0 : i32
    %30 = arith.cmpi ne, %29, %c0_i32_14 : i32
    scf.if %30 {
      %c0_15 = arith.constant 0 : index
      %c0_16 = arith.constant 0 : index
      %31 = vector.load %arg8[%c0_15, %c0_16] : memref<16x128xf32, #tpu.memory_space<vmem>>, vector<16x128xf32>
      %c0_17 = arith.constant 0 : index
      %c0_18 = arith.constant 0 : index
      %32 = vector.load %arg6[%c0_17, %c0_18] : memref<1x128xf32, #tpu.memory_space<vmem>>, vector<1x128xf32>
      %33 = vector.broadcast %32 : vector<1x128xf32> to vector<16x128xf32>
      %34 = arith.addf %31, %33 : vector<16x128xf32>
      %c0_19 = arith.constant 0 : index
      %c0_20 = arith.constant 0 : index
      %35 = vector.load %arg7[%c0_19, %c0_20] : memref<16x128xf32, #tpu.memory_space<vmem>>, vector<16x128xf32>
      tpu.vector_store %arg7[%c0_19, %c0_20], %34 {strides = array<i32>} : memref<16x128xf32, #tpu.memory_space<vmem>>, vector<16x128xf32>,
    } else {
    }
    return
  }
  func.func @transform_0(%arg0: i32, %arg1: i32) -> (i32, i32) {
    %c0_i32 = arith.constant 0 : i32
    %c0_i32_0 = arith.constant 0 : i32
    return %arg0, %c0_i32 : i32, i32
  }
  func.func @transform_1(%arg0: i32, %arg1: i32) -> (i32, i32) {
    %c0_i32 = arith.constant 0 : i32
    %c0_i32_0 = arith.constant 0 : i32
    %c0_i32_1 = arith.constant 0 : i32
    return %c0_i32, %c0_i32_0 : i32, i32
  }
  func.func @transform_2(%arg0: i32, %arg1: i32) -> (i32, i32) {
    %c0_i32 = arith.constant 0 : i32
    %c0_i32_0 = arith.constant 0 : i32
    %c0_i32_1 = arith.constant 0 : i32
    return %c0_i32, %c0_i32_0 : i32, i32
  }
  func.func @transform_3(%arg0: i32, %arg1: i32) -> (i32, i32) {
    %c0_i32 = arith.constant 0 : i32
    %c0_i32_0 = arith.constant 0 : i32
    %c0_i32_1 = arith.constant 0 : i32
    return %c0_i32, %c0_i32_0 : i32, i32
  }
  func.func @transform_4(%arg0: i32, %arg1: i32) -> (i32, i32) {
    %c0_i32 = arith.constant 0 : i32
    %c0_i32_0 = arith.constant 0 : i32
    %c0_i32_1 = arith.constant 0 : i32
    return %c0_i32, %c0_i32_0 : i32, i32
  }
  func.func @transform_5(%arg0: i32, %arg1: i32) -> (i32, i32) {
    %c0_i32 = arith.constant 0 : i32
    %c0_i32_0 = arith.constant 0 : i32
    return %arg0, %c0_i32 : i32, i32
  }
}

</mosaic_0001>

<llo_original>
// kernel: tpu_custom_call.1
$region0: #{tpu_custom_call.1}
  #allocation0 [shape = 'u32[]', space=smem, size = 0x4, offset = 0x4, fixed_abs, tag = 'smem constant byte address 0x4 - core index']
  #allocation1 [shape = 'u32[144,128]{1,0:T(1,128)}', space=vmem, size = 0x12000, scoped, tag = 'internal scratch']
  #allocation2 [shape = 'f32[16,128]{1,0:T(8,128)}', space=vmem, size = 0x2000, scoped, tag = 'scratch operand']
  %s0 = inlined_call_operand.hbm [shape: bf16[16,32], index: 0, kind: input, shape index: {}]
  %s1 = inlined_call_operand.hbm [shape: bf16[32,128], index: 1, kind: input, shape index: {}]
  %s2 = inlined_call_operand.vmem [shape: f32[1,128], index: 2, kind: input, shape index: {}]
  %s3 = inlined_call_operand.hbm [shape: bf16[128,128], index: 3, kind: input, shape index: {}]
  %s4 = inlined_call_operand.vmem [shape: f32[1,128], index: 4, kind: input, shape index: {}]
  %s5 = inlined_call_operand.hbm [shape: f32[16,128], index: 5, kind: output, shape index: {}]
  %s6 = sld [smem:[#allocation0]]
  $region50: #{tpu_custom_call.1} parent=0
    _
  %s8 = ssub.s32 1, %s6
  %s9 = scalar_select 0, %s8, %s6
  $region1: #{tpu_custom_call.1} parent=0
    #allocation3 [shape = 'u8[4096]{0}', space=vmem, size = 0x1000, scoped, tag = 'input window, operand 0, single buffered']
    #allocation4 [shape = 's32[1]{0}', space=sflag, size = 0x4, scoped, tag = 'scoped memory for tpu_custom_call.1']
    #allocation5 [shape = 's32[1]{0}', space=sflag, size = 0x4, scoped, tag = 'scoped memory for tpu_custom_call.1']
    #allocation6 [shape = 'u8[8192]{0}', space=vmem, size = 0x2000, scoped, tag = 'input window, operand 1, single buffered']
    #allocation7 [shape = 's32[1]{0}', space=sflag, size = 0x4, scoped, tag = 'scoped memory for tpu_custom_call.1']
    #allocation8 [shape = 'u8[32768]{0}', space=vmem, size = 0x8000, scoped, tag = 'input window, operand 3, single buffered']
    #allocation9 [shape = 'u8[8192]{0}', space=vmem, size = 0x2000, scoped, tag = 'output window, operand 0, single buffered']
    %10 = vsyncpa [#allocation4], 0
    %11 = vsyncpa [#allocation7], 0
    %12 = vsyncpa [#allocation5], 0
    // Predicated region
    $region2: #{tpu_custom_call.1} parent=1 // pred_check
      _
    $region3: #{tpu_custom_call.1} parent=1 // pred_check_branch
      %14 = sbr.rel (0) target = $region5
    $region4: #{tpu_custom_call.1} parent=1 // pred_region
      %s16 = ssub.s32 128, 128
      %17 = vsyncadd [#allocation4], %s16
      %s18 = sshll.u32 [#allocation3], 4
      %s19 = int_to_ptr.vmem [resolvable:$true] %s18
      %24 = dma.hbm_to_vmem [thread:$0]  %s0, 128, %s19, [#allocation4], 64, 64, 4
    $region5: #{tpu_custom_call.1} parent=1 // pred_fallthru
      _
    // Predicated region
    $region6: #{tpu_custom_call.1} parent=1 // pred_check
      _
    $region7: #{tpu_custom_call.1} parent=1 // pred_check_branch
      %26 = sbr.rel (0) target = $region9
    $region8: #{tpu_custom_call.1} parent=1 // pred_region
      %s28 = ssub.s32 256, 256
      %29 = vsyncadd [#allocation7], %s28
      %s30 = sshll.u32 [#allocation6], 4
      %s31 = int_to_ptr.vmem [resolvable:$true] %s30
      %36 = dma.hbm_to_vmem [thread:$0]  %s1, 256, %s31, [#allocation7], 64, 64, 4
    $region9: #{tpu_custom_call.1} parent=1 // pred_fallthru
      _
    // Predicated region
    $region10: #{tpu_custom_call.1} parent=1 // pred_check
      _
    $region11: #{tpu_custom_call.1} parent=1 // pred_check_branch
      %38 = sbr.rel (0) target = $region13
    $region12: #{tpu_custom_call.1} parent=1 // pred_region
      _
    $region13: #{tpu_custom_call.1} parent=1 // pred_fallthru
      _
    // Predicated region
    $region14: #{tpu_custom_call.1} parent=1 // pred_check
      _
    $region15: #{tpu_custom_call.1} parent=1 // pred_check_branch
      %40 = sbr.rel (0) target = $region17
    $region16: #{tpu_custom_call.1} parent=1 // pred_region
      %s42 = ssub.s32 1024, 1024
      %43 = vsyncadd [#allocation7], %s42
      %s44 = sshll.u32 [#allocation8], 4
      %s45 = int_to_ptr.vmem [resolvable:$true] %s44
      %50 = dma.hbm_to_vmem [thread:$0]  %s3, 1024, %s45, [#allocation7], 64, 64, 4
    $region17: #{tpu_custom_call.1} parent=1 // pred_fallthru
      _
    // Predicated region
    $region18: #{tpu_custom_call.1} parent=1 // pred_check
      _
    $region19: #{tpu_custom_call.1} parent=1 // pred_check_branch
      %52 = sbr.rel (0) target = $region21
    $region20: #{tpu_custom_call.1} parent=1 // pred_region
      _
    $region21: #{tpu_custom_call.1} parent=1 // pred_fallthru
      _
    // Predicated region
    $region22: #{tpu_custom_call.1} parent=1 // pred_check
      _
    $region23: #{tpu_custom_call.1} parent=1 // pred_check_branch
      %54 = sbr.rel (0) target = $region25
    $region24: #{tpu_custom_call.1} parent=1 // pred_region
      %55 = dma.done [#allocation4], 128
    $region25: #{tpu_custom_call.1} parent=1 // pred_fallthru
      _
    // Predicated region
    $region26: #{tpu_custom_call.1} parent=1 // pred_check
      _
    $region27: #{tpu_custom_call.1} parent=1 // pred_check_branch
      %57 = sbr.rel (0) target = $region29
    $region28: #{tpu_custom_call.1} parent=1 // pred_region
      %58 = dma.done [#allocation7], 256
    $region29: #{tpu_custom_call.1} parent=1 // pred_fallthru
      _
    // Predicated region
    $region30: #{tpu_custom_call.1} parent=1 // pred_check
      _
    $region31: #{tpu_custom_call.1} parent=1 // pred_check_branch
      %60 = sbr.rel (0) target = $region33
    $region32: #{tpu_custom_call.1} parent=1 // pred_region
      %61 = dma.done [#allocation7], 1024
    $region33: #{tpu_custom_call.1} parent=1 // pred_fallthru
      _
    %p63 = scmp.eq.s32.totalorder 0, 0
    // Predicated region
    $region34: #{tpu_custom_call.1} parent=1 // pred_check
      %p64 = pneg %p63
    $region35: #{tpu_custom_call.1} parent=1 // pred_check_branch
      %66 = sbr.rel (%p64) target = $region37
    $region36: #{tpu_custom_call.1} parent=1 // pred_region
      %67 = vst [vmem:[#allocation2] sm:$0xff] 0.0
      %68 = vst [vmem:[#allocation2 + $0x8] sm:$0xff] 0.0
    $region37: #{tpu_custom_call.1} parent=1 // pred_fallthru
      _
    %s69 = smul.u32 0, 128
    %s70 = sshra.s32 %s69, 7
    %s71 = sand.u32 %s69, 127
    %s72 = smul.addr %s70, 4
    %s73 = scalar_lea.vmem [#allocation6], %s72
    %v74 = vld [vmem:[%s73] sm:$0xf]
    %v75 = vld [vmem:[%s73 + $0x4] sm:$0xf]
    %v76 = vld [vmem:[%s73 + $0x8] sm:$0xf]
    %v77 = vld [vmem:[%s73 + $0xc] sm:$0xf]
    %s78 = sshra.s32 %s69, 3
    %s79 = sand.u32 %s69, 7
    %s80 = smul.addr %s78, 4
    %s81 = scalar_lea.vmem [#allocation8], %s80
    %v82 = vld [vmem:[%s81] sm:$0xf]
    %v83 = vld [vmem:[%s81 + $0x4] sm:$0xf]
    %v84 = vld [vmem:[%s81 + $0x8] sm:$0xf]
    %v85 = vld [vmem:[%s81 + $0xc] sm:$0xf]
    %v86 = vld [vmem:[%s81 + $0x10] sm:$0xf]
    %v87 = vld [vmem:[%s81 + $0x14] sm:$0xf]
    %v88 = vld [vmem:[%s81 + $0x18] sm:$0xf]
    %v89 = vld [vmem:[%s81 + $0x1c] sm:$0xf]
    %v90 = vld [vmem:[%s81 + $0x20] sm:$0xf]
    %v91 = vld [vmem:[%s81 + $0x24] sm:$0xf]
    %v92 = vld [vmem:[%s81 + $0x28] sm:$0xf]
    %v93 = vld [vmem:[%s81 + $0x2c] sm:$0xf]
    %v94 = vld [vmem:[%s81 + $0x30] sm:$0xf]
    %v95 = vld [vmem:[%s81 + $0x34] sm:$0xf]
    %v96 = vld [vmem:[%s81 + $0x38] sm:$0xf]
    %v97 = vld [vmem:[%s81 + $0x3c] sm:$0xf]
    %s98 = scalar_lea.vmem %s2, %s70
    %v99 = vld [vmem:[%s98] sm:$0x1]
    %v100 = vld [vmem:[#allocation3] sm:$0xf]
    %v101 = vld [vmem:[#allocation3 + $0x4] sm:$0xf]
    %v103 = vlaneseq
    %v104 = vshrl.u32 %v103, 7
    %v105 = vsub.s32 0, %v104
    %v106 = vrot.slane %v99, %v105
    %v110 = vunpack.c.l.b16 %v100
    %v111 = vunpack.c.l.b16 %v101
    %v112 = vpack.c.b16 %v111, %v110
    %v117 = vunpack.c.l.b16 %v74
    %v118 = vunpack.c.l.b16 %v75
    %v119 = vunpack.c.l.b16 %v76
    %v120 = vunpack.c.l.b16 %v77
    %v121 = vpack.c.b16 %v118, %v117
    %v122 = vpack.c.b16 %v120, %v119
    %vm125 = vcmask 261120
    %v127 = vsel %vm125, %v112, 0
    %129 = vmatprep.subr.bf16.mxu0 0
    %130 = vmatpush1.bf16.msra.mxu0 0
    %131 = vmatprep.subr.bf16.mxu0 0
    %132 = vmatpush1.bf16.msra.mxu0 0
    %133 = vmatprep.subr.bf16.mxu0 0
    %134 = vmatpush1.bf16.msra.mxu0 0
    %135 = vmatprep.subr.bf16.mxu0 0
    %136 = vmatpush1.bf16.msra.mxu0 0
    %137 = vmatprep.subr.bf16.mxu0 0
    %138 = vmatpush1.bf16.msra.mxu0 0
    %139 = vmatprep.subr.bf16.mxu0 0
    %140 = vmatpush1.bf16.msra.mxu0 0
    %141 = vmatprep.subr.bf16.mxu0 0
    %142 = vmatpush1.bf16.msra.mxu0 %v122
    %143 = vmatprep.subr.bf16.mxu0 0
    %144 = vmatpush1.bf16.msra.mxu0 %v121
    %145 = vmatprep.subr.bf16.mxu0 0
    %146 = vmatpush2.bf16.msra.mxu0 0
    %147 = vmatprep.subr.bf16.mxu0 0
    %148 = vmatpush2.bf16.msra.mxu0 0
    %149 = vmatprep.subr.bf16.mxu0 0
    %150 = vmatpush2.bf16.msra.mxu0 0
    %151 = vmatprep.subr.bf16.mxu0 0
    %152 = vmatpush2.bf16.msra.mxu0 0
    %153 = vmatprep.subr.bf16.mxu0 0
    %154 = vmatpush2.bf16.msra.mxu0 0
    %155 = vmatprep.subr.bf16.mxu0 0
    %156 = vmatpush2.bf16.msra.mxu0 0
    %157 = vmatprep.subr.bf16.mxu0 0
    %158 = vmatpush2.bf16.msra.mxu0 0
    %159 = vmatprep.subr.bf16.mxu0 0
    %160 = vmatpush2.bf16.msra.mxu0 0
    %161 = vmatprep.mubr.bf16.mxu0 0
    %162 = vmatmul.mubr.bf16.gmra.mxu0 %v127
    %v163 = vpop.f32.mrf.mxu0
    %v164 = vadd.f32 %v106, %v163
    %v165 = vpop.f32.mrf.mxu0
    %v166 = vpop.f32.mrf.mxu0
    %v167 = vadd.f32 %v106, %v166
    %v168 = vpop.f32.mrf.mxu0
    %169 = vdwg.mxu0
    %v170 = vmul.f32 %v164, 0.5
    %v171 = vmul.f32 %v167, 0.5
    %v172 = vmul.f32 %v164, 0.70710677
    %v173 = vmul.f32 %v167, 0.70710677
    %v174 = verf.f32.pop %v172
    %v175 = verf.f32.pop %v173
    %v176 = vadd.f32 %v174, 1.0
    %v177 = vadd.f32 %v175, 1.0
    %v178 = vmul.f32 %v170, %v176
    %v179 = vmul.f32 %v171, %v177
    %v180 = vld [vmem:[#allocation2] sm:$0xff]
    %v181 = vld [vmem:[#allocation2 + $0x8] sm:$0xff]
    %v182 = vpack.c.bf16 %v179, %v178
    %v199 = vunpack.c.l.b16 %v82
    %v200 = vunpack.c.l.b16 %v83
    %v201 = vunpack.c.l.b16 %v84
    %v202 = vunpack.c.l.b16 %v85
    %v203 = vunpack.c.l.b16 %v86
    %v204 = vunpack.c.l.b16 %v87
    %v205 = vunpack.c.l.b16 %v88
    %v206 = vunpack.c.l.b16 %v89
    %v207 = vunpack.c.l.b16 %v90
    %v208 = vunpack.c.l.b16 %v91
    %v209 = vunpack.c.l.b16 %v92
    %v210 = vunpack.c.l.b16 %v93
    %v211 = vunpack.c.l.b16 %v94
    %v212 = vunpack.c.l.b16 %v95
    %v213 = vunpack.c.l.b16 %v96
    %v214 = vunpack.c.l.b16 %v97
    %v215 = vpack.c.b16 %v200, %v199
    %v216 = vpack.c.b16 %v202, %v201
    %v217 = vpack.c.b16 %v204, %v203
    %v218 = vpack.c.b16 %v206, %v205
    %v219 = vpack.c.b16 %v208, %v207
    %v220 = vpack.c.b16 %v210, %v209
    %v221 = vpack.c.b16 %v212, %v211
    %v222 = vpack.c.b16 %v214, %v213
    %231 = vmatprep.subr.bf16.mxu0 0
    %232 = vmatpush1.bf16.msra.mxu0 %v222
    %233 = vmatprep.subr.bf16.mxu0 0
    %234 = vmatpush1.bf16.msra.mxu0 %v221
    %235 = vmatprep.subr.bf16.mxu0 0
    %236 = vmatpush1.bf16.msra.mxu0 %v220
    %237 = vmatprep.subr.bf16.mxu0 0
    %238 = vmatpush1.bf16.msra.mxu0 %v219
    %239 = vmatprep.subr.bf16.mxu0 0
    %240 = vmatpush1.bf16.msra.mxu0 %v218
    %241 = vmatprep.subr.bf16.mxu0 0
    %242 = vmatpush1.bf16.msra.mxu0 %v217
    %243 = vmatprep.subr.bf16.mxu0 0
    %244 = vmatpush1.bf16.msra.mxu0 %v216
    %245 = vmatprep.subr.bf16.mxu0 0
    %246 = vmatpush1.bf16.msra.mxu0 %v215
    %247 = vmatprep.subr.bf16.mxu0 0
    %248 = vmatpush2.bf16.msra.mxu0 0
    %249 = vmatprep.subr.bf16.mxu0 0
    %250 = vmatpush2.bf16.msra.mxu0 0
    %251 = vmatprep.subr.bf16.mxu0 0
    %252 = vmatpush2.bf16.msra.mxu0 0
    %253 = vmatprep.subr.bf16.mxu0 0
    %254 = vmatpush2.bf16.msra.mxu0 0
    %255 = vmatprep.subr.bf16.mxu0 0
    %256 = vmatpush2.bf16.msra.mxu0 0
    %257 = vmatprep.subr.bf16.mxu0 0
    %258 = vmatpush2.bf16.msra.mxu0 0
    %259 = vmatprep.subr.bf16.mxu0 0
    %260 = vmatpush2.bf16.msra.mxu0 0
    %261 = vmatprep.subr.bf16.mxu0 0
    %262 = vmatpush2.bf16.msra.mxu0 0
    %263 = vmatprep.mubr.bf16.mxu0 0
    %264 = vmatmul.mubr.bf16.gmra.mxu0 %v182
    %v265 = vpop.f32.mrf.mxu0
    %v266 = vadd.f32 0.0, %v265
    %v267 = vpop.f32.mrf.mxu0
    %v268 = vpop.f32.mrf.mxu0
    %v269 = vadd.f32 0.0, %v268
    %v270 = vpop.f32.mrf.mxu0
    %271 = vdwg.mxu0
    %v272 = vadd.f32 %v180, %v266
    %v273 = vadd.f32 %v181, %v269
    %274 = vst [vmem:[#allocation2] sm:$0xff] %v272
    %275 = vst [vmem:[#allocation2 + $0x8] sm:$0xff] %v273
    // Predicated region
    $region38: #{tpu_custom_call.1} parent=1 // pred_check
      %p276 = pneg %p63
    $region39: #{tpu_custom_call.1} parent=1 // pred_check_branch
      %278 = sbr.rel (%p276) target = $region41
    $region40: #{tpu_custom_call.1} parent=1 // pred_region
      %v279 = vld [vmem:[#allocation2] sm:$0xff]
      %v280 = vld [vmem:[#allocation2 + $0x8] sm:$0xff]
      %v281 = vld [vmem:[%s4] sm:$0x1]
      %v283 = vlaneseq
      %v284 = vshrl.u32 %v283, 7
      %v285 = vsub.s32 0, %v284
      %v286 = vrot.slane %v281, %v285
      %v288 = vadd.f32 %v279, %v286
      %v289 = vadd.f32 %v280, %v286
      %290 = vst [vmem:[#allocation9] sm:$0xff] %v288
      %291 = vst [vmem:[#allocation9 + $0x8] sm:$0xff] %v289
    $region41: #{tpu_custom_call.1} parent=1 // pred_fallthru
      _
    // Predicated region
    $region42: #{tpu_custom_call.1} parent=1 // pred_check
      _
    $region43: #{tpu_custom_call.1} parent=1 // pred_check_branch
      %293 = sbr.rel (0) target = $region45
    $region44: #{tpu_custom_call.1} parent=1 // pred_region
      %s295 = ssub.s32 256, 256
      %296 = vsyncadd [#allocation5], %s295
      %s297 = sshll.u32 [#allocation9], 4
      %s298 = int_to_ptr.vmem [resolvable:$true] %s297
      %303 = dma.vmem_to_hbm [thread:$0]  %s298, 256, %s5, [#allocation5], 128, 128, 8
    $region45: #{tpu_custom_call.1} parent=1 // pred_fallthru
      _
    // Predicated region
    $region46: #{tpu_custom_call.1} parent=1 // pred_check
      _
    $region47: #{tpu_custom_call.1} parent=1 // pred_check_branch
      %305 = sbr.rel (0) target = $region49
    $region48: #{tpu_custom_call.1} parent=1 // pred_region
      %306 = dma.done [#allocation5], 256
    $region49: #{tpu_custom_call.1} parent=1 // pred_fallthru
      _
    %307 = vsyncpa [#allocation4], 1
    %308 = vsyncpa [#allocation7], 1
    %309 = vsyncpa [#allocation5], 1

</llo_original>
